<compile_context>
chip_gen: v7x
topology: tpu7x:2x2x1
jax: 0.10.0
libtpu: 0.0.40
codegen_flags: <defaults>
</compile_context>

<pallas_src>
import jax
import jax.numpy as jnp
from jax.experimental import pallas as pl
from jax.experimental.pallas import tpu as pltpu

NUM_CLASSES = 4          # len(INFO['octmnist']['label'])
FEAT_DIM = 384
HIDDEN_DIM = 128
OUT_PAD = 128            # lane-dense padded class dimension
BN_EPS = 1e-5


def _round_up(x, m):
    return ((x + m - 1) // m) * m


def _head_kernel(x_ref,        # (TB, C*H*W)   flattened input tile
                 wa_ref,       # (C*H*W, 128)  fused pool+proj+fc0+BN weight
                 wb_ref,       # (128, 128)    fc[4] weight, class dim zero-padded
                 bias_ref,     # (2, 128)      row 0: fused bias, row 1: padded b2 (f32)
                 out_ref):     # (TB, 128)     padded logits
    # Fused GAP + backbone-projection + fc[0] + BatchNorm1d(eval): one MXU matmul.
    h = jnp.dot(x_ref[...], wa_ref[...], preferred_element_type=jnp.float32)
    h = h + bias_ref[0:1, :]          # fused bias (kept f32 for the epilogue)
    # fc[2]: ReLU.  fc[3]: Dropout(0.5) is identity in eval mode.
    h = jnp.maximum(h, 0.0)
    # fc[4]: Linear(128, num_classes) on a lane-dense (128-wide) padded output.
    out = jnp.dot(h.astype(wb_ref.dtype), wb_ref[...],
                  preferred_element_type=jnp.float32) + bias_ref[1:2, :]
    out_ref[...] = out.astype(out_ref.dtype)


def _fuse_params(params, H, W, compute_dtype):
    """Trace-time parameter folding (eval mode).

    pooled = mean_{hw} x[b, c, hw]            -> fold 1/(H*W) + row-repeat into wp
    feats  = pooled @ wp + bp
    h      = feats @ w1 + b1                  -> fold wp @ w1 (no nonlinearity between)
    h      = (h - mean) * gamma/sqrt(var+eps) + beta   -> fold scale into columns / bias
    """
    s = params["gamma"] * jax.lax.rsqrt(params["var"] + BN_EPS)            # (1, 128)
    w_proj = params["wp"] @ params["w1"]                                   # (C, 128)
    wa = jnp.repeat(w_proj / float(H * W), H * W, axis=0) * s              # (C*H*W, 128)
    ba = (params["bp"] @ params["w1"] + params["b1"] - params["mean"]) * s + params["beta"]
    wb = jnp.zeros((HIDDEN_DIM, OUT_PAD), jnp.float32).at[:, :NUM_CLASSES].set(params["w2"])
    bb = jnp.zeros((1, OUT_PAD), jnp.float32).at[:, :NUM_CLASSES].set(params["b2"])
    return {
        "wa": wa.astype(compute_dtype),
        "wb": wb.astype(compute_dtype),
        # Biases concatenated into one small (2, 128) VMEM block; stay f32 so the
        # bias/ReLU epilogue is f32 even when the matmuls run in bf16 (v5e VPU has no bf16).
        "bias": jnp.concatenate([ba, bb], axis=0).astype(jnp.float32),
    }


def finetuned_model_forward(x, params, *, block_b=256, compute_dtype=jnp.float32):
    """Full forward pass as a batch-tiled Pallas kernel.

    x: (B, C, H, W) NCHW input.  Returns (B, NUM_CLASSES) f32 logits.
    """
    B, C, H, W = x.shape
    K = C * H * W
    fused = _fuse_params(params, H, W, compute_dtype)

    # Batch tile: multiple of 8 (sublane), capped at block_b (multiple of the
    # 128/256 MXU M dimension for realistic batches; a single small tile for
    # tiny serving batches so no unnecessary grid-step overhead is paid).
    TB = min(_round_up(block_b, 8), _round_up(B, 8))
    B_pad = _round_up(B, TB)

    x_flat = x.reshape(B, K).astype(compute_dtype)          # lane-dense last dim
    if B_pad != B:
        x_flat = jnp.pad(x_flat, ((0, B_pad - B), (0, 0)))

    grid = (B_pad // TB,)

    # VMEM budget: double-buffered input/output tiles + resident params + margin,
    # clamped to the v7x 64 MiB physical VMEM.
    itemsize = jnp.dtype(compute_dtype).itemsize
    vmem_needed = (
        2 * TB * K * itemsize                     # input tiles (double-buffered)
        + 2 * TB * OUT_PAD * 4                    # output tiles (f32)
        + 2 * (K * HIDDEN_DIM + HIDDEN_DIM * OUT_PAD) * itemsize
        + 2 * 2 * OUT_PAD * 4
    )
    vmem_limit = int(min(64 << 20, max(vmem_needed + (4 << 20), 16 << 20)))

    grid_spec = pltpu.PrefetchScalarGridSpec(
        num_scalar_prefetch=0,
        grid=grid,
        in_specs=[
            pl.BlockSpec((TB, K), lambda i: (i, 0)),                 # batch-tiled input
            pl.BlockSpec((K, HIDDEN_DIM), lambda i: (0, 0)),         # grid-invariant params
            pl.BlockSpec((HIDDEN_DIM, OUT_PAD), lambda i: (0, 0)),
            pl.BlockSpec((2, OUT_PAD), lambda i: (0, 0)),
        ],
        out_specs=pl.BlockSpec((TB, OUT_PAD), lambda i: (i, 0)),
    )

    out_padded = pl.pallas_call(
        _head_kernel,
        out_shape=jax.ShapeDtypeStruct((B_pad, OUT_PAD), jnp.float32),
        grid_spec=grid_spec,
        compiler_params=pltpu.CompilerParams(
            dimension_semantics=("parallel",),       # v7x: split batch tiles across 2 TCs
            vmem_limit_bytes=vmem_limit,
        ),
    )(x_flat, fused["wa"], fused["wb"], fused["bias"])

    return out_padded[:B, :NUM_CLASSES]


def init_params(key, in_channels):
    """Deterministic synthetic parameter init (shapes from the module __init__)."""
    keys = jax.random.split(key, 8)
    scale = 0.02
    params = {
        # backbone stand-in projection C -> 384
        "wp": scale * jax.random.normal(keys[0], (in_channels, FEAT_DIM), jnp.float32),
        "bp": scale * jax.random.normal(keys[1], (1, FEAT_DIM), jnp.float32),
        # fc[0]: Linear(384, 128)
        "w1": scale * jax.random.normal(keys[2], (FEAT_DIM, HIDDEN_DIM), jnp.float32),
        "b1": scale * jax.random.normal(keys[3], (1, HIDDEN_DIM), jnp.float32),
        # fc[1]: BatchNorm1d(128) — affine + running stats (eval mode)
        "gamma": jnp.ones((1, HIDDEN_DIM), jnp.float32),
        "beta": jnp.zeros((1, HIDDEN_DIM), jnp.float32),
        "mean": 0.1 * jax.random.normal(keys[4], (1, HIDDEN_DIM), jnp.float32),
        "var": jnp.abs(1.0 + 0.1 * jax.random.normal(keys[5], (1, HIDDEN_DIM), jnp.float32)),
        # fc[4]: Linear(128, num_classes)   (stored (in, out); transpose PyTorch ckpts)
        "w2": scale * jax.random.normal(keys[6], (HIDDEN_DIM, NUM_CLASSES), jnp.float32),
        "b2": scale * jax.random.normal(keys[7], (1, NUM_CLASSES), jnp.float32),
    }
    return params


def reference_forward(x, params):
    """Plain-JAX reference of the same (unfused) computation."""
    pooled = jnp.mean(x.astype(jnp.float32), axis=(2, 3))
    feats = pooled @ params["wp"] + params["bp"]
    h = feats @ params["w1"] + params["b1"]
    h = (h - params["mean"]) * jax.lax.rsqrt(params["var"] + BN_EPS) \
        * params["gamma"] + params["beta"]
    h = jnp.maximum(h, 0.0)
    return h @ params["w2"] + params["b2"]


if __name__ == "__main__":
    key = jax.random.PRNGKey(0)
    k_x, k_p = jax.random.split(key)

    # small NCHW input: batch=2, channels=4, spatial=16x16
    B, C, H, W = 2, 4, 16, 16
    x = jax.random.normal(k_x, (B, C, H, W), jnp.float32)
    params = init_params(k_p, C)

    out = finetuned_model_forward(x, params)
    out = jax.block_until_ready(out)

    ref = reference_forward(x, params)
    assert out.shape == (B, NUM_CLASSES), out.shape
    assert jnp.allclose(out, ref, atol=1e-4, rtol=1e-4), \
        f"max abs err {jnp.max(jnp.abs(out - ref))}"

    print("KERNEL_OK")
</pallas_src>

<mosaic_0001>
module attributes {stable_mosaic.version = 11 : i64} {
  func.func @_head_kernel(%arg0: i32, %arg1: memref<8x1024xf32, #tpu.memory_space<vmem>>, %arg2: memref<1024x128xf32, #tpu.memory_space<vmem>>, %arg3: memref<128x128xf32, #tpu.memory_space<vmem>>, %arg4: memref<2x128xf32, #tpu.memory_space<vmem>>, %arg5: memref<8x128xf32, #tpu.memory_space<vmem>>) attributes {dimension_semantics = [#tpu.dimension_semantics<parallel>], iteration_bounds = array<i64: 1>, scalar_prefetch = 0 : i64, scratch_operands = 0 : i64, tpu.core_type = #tpu.core_type<tc>, window_params = [{transform_indices = @transform_0, window_bounds = array<i64: 8, 1024>}, {pipeline_mode = #tpu.pipeline_mode<synchronous>, transform_indices = @transform_1, window_bounds = array<i64: 1024, 128>}, {pipeline_mode = #tpu.pipeline_mode<synchronous>, transform_indices = @transform_2, window_bounds = array<i64: 128, 128>}, {pipeline_mode = #tpu.pipeline_mode<synchronous>, transform_indices = @transform_3, window_bounds = array<i64: 2, 128>}, {transform_indices = @transform_4, window_bounds = array<i64: 8, 128>}]} {
    %c0 = arith.constant 0 : index
    %c0_0 = arith.constant 0 : index
    %0 = vector.load %arg1[%c0, %c0_0] : memref<8x1024xf32, #tpu.memory_space<vmem>>, vector<8x1024xf32>
    %c0_1 = arith.constant 0 : index
    %c0_2 = arith.constant 0 : index
    %1 = vector.load %arg2[%c0_1, %c0_2] : memref<1024x128xf32, #tpu.memory_space<vmem>>, vector<1024x128xf32>
    %cst = arith.constant dense<0.000000e+00> : vector<8x128xf32>
    %2 = tpu.matmul %0, %1, %cst {dimension_numbers = #tpu.dot_dimension_numbers<[1], [0], [0], [1], [0, 0, 1, 1], [], []>} : vector<8x1024xf32>, vector<1024x128xf32>, vector<8x128xf32> -> vector<8x128xf32>
    %c0_3 = arith.constant 0 : index
    %c0_4 = arith.constant 0 : index
    %3 = vector.load %arg4[%c0_3, %c0_4] : memref<2x128xf32, #tpu.memory_space<vmem>>, vector<1x128xf32>
    %4 = vector.broadcast %3 : vector<1x128xf32> to vector<8x128xf32>
    %5 = arith.addf %2, %4 : vector<8x128xf32>
    %cst_5 = arith.constant 0.000000e+00 : f32
    %6 = vector.broadcast %cst_5 : f32 to vector<8x128xf32>
    %7 = arith.maximumf %5, %6 : vector<8x128xf32>
    %c0_6 = arith.constant 0 : index
    %c0_7 = arith.constant 0 : index
    %8 = vector.load %arg3[%c0_6, %c0_7] : memref<128x128xf32, #tpu.memory_space<vmem>>, vector<128x128xf32>
    %cst_8 = arith.constant dense<0.000000e+00> : vector<8x128xf32>
    %9 = tpu.matmul %7, %8, %cst_8 {dimension_numbers = #tpu.dot_dimension_numbers<[1], [0], [0], [1], [0, 0, 1, 1], [], []>} : vector<8x128xf32>, vector<128x128xf32>, vector<8x128xf32> -> vector<8x128xf32>
    %c1 = arith.constant 1 : index
    %c0_9 = arith.constant 0 : index
    %10 = vector.load %arg4[%c1, %c0_9] : memref<2x128xf32, #tpu.memory_space<vmem>>, vector<1x128xf32>
    %11 = vector.broadcast %10 : vector<1x128xf32> to vector<8x128xf32>
    %12 = arith.addf %9, %11 : vector<8x128xf32>
    %c0_10 = arith.constant 0 : index
    %c0_11 = arith.constant 0 : index
    %13 = vector.load %arg5[%c0_10, %c0_11] : memref<8x128xf32, #tpu.memory_space<vmem>>, vector<8x128xf32>
    tpu.vector_store %arg5[%c0_10, %c0_11], %12 {strides = array<i32>} : memref<8x128xf32, #tpu.memory_space<vmem>>, vector<8x128xf32>,
    return
  }
  func.func @transform_0(%arg0: i32) -> (i32, i32) {
    %c0_i32 = arith.constant 0 : i32
    %c0_i32_0 = arith.constant 0 : i32
    return %arg0, %c0_i32 : i32, i32
  }
  func.func @transform_1(%arg0: i32) -> (i32, i32) {
    %c0_i32 = arith.constant 0 : i32
    %c0_i32_0 = arith.constant 0 : i32
    %c0_i32_1 = arith.constant 0 : i32
    return %c0_i32, %c0_i32_0 : i32, i32
  }
  func.func @transform_2(%arg0: i32) -> (i32, i32) {
    %c0_i32 = arith.constant 0 : i32
    %c0_i32_0 = arith.constant 0 : i32
    %c0_i32_1 = arith.constant 0 : i32
    return %c0_i32, %c0_i32_0 : i32, i32
  }
  func.func @transform_3(%arg0: i32) -> (i32, i32) {
    %c0_i32 = arith.constant 0 : i32
    %c0_i32_0 = arith.constant 0 : i32
    %c0_i32_1 = arith.constant 0 : i32
    return %c0_i32, %c0_i32_0 : i32, i32
  }
  func.func @transform_4(%arg0: i32) -> (i32, i32) {
    %c0_i32 = arith.constant 0 : i32
    %c0_i32_0 = arith.constant 0 : i32
    return %arg0, %c0_i32 : i32, i32
  }
}

</mosaic_0001>

<llo_original>
// kernel: tpu_custom_call.1
$region0: #{tpu_custom_call.1}
  #allocation0 [shape = 'u32[]', space=smem, size = 0x4, offset = 0x4, fixed_abs, tag = 'smem constant byte address 0x4 - core index']
  #allocation1 [shape = 'u32[144,128]{1,0:T(1,128)}', space=vmem, size = 0x12000, scoped, tag = 'internal scratch']
  %s0 = inlined_call_operand.hbm [shape: f32[8,1024], index: 0, kind: input, shape index: {}]
  %s1 = inlined_call_operand.hbm [shape: f32[1024,128], index: 1, kind: input, shape index: {}]
  %s2 = inlined_call_operand.hbm [shape: f32[128,128], index: 2, kind: input, shape index: {}]
  %s3 = inlined_call_operand.vmem [shape: f32[2,128], index: 3, kind: input, shape index: {}]
  %s4 = inlined_call_operand.hbm [shape: f32[8,128], index: 4, kind: output, shape index: {}]
  %s5 = sld [smem:[#allocation0]]
  $region38: #{tpu_custom_call.1} parent=0
    _
  %s7 = ssub.s32 1, %s5
  %s8 = scalar_select 0, %s7, %s5
  $region1: #{tpu_custom_call.1} parent=0
    #allocation2 [shape = 'u8[32768]{0}', space=vmem, size = 0x8000, scoped, tag = 'input window, operand 0, single buffered']
    #allocation3 [shape = 's32[1]{0}', space=sflag, size = 0x4, scoped, tag = 'scoped memory for tpu_custom_call.1']
    #allocation4 [shape = 's32[1]{0}', space=sflag, size = 0x4, scoped, tag = 'scoped memory for tpu_custom_call.1']
    #allocation5 [shape = 'u8[524288]{0}', space=vmem, size = 0x80000, scoped, tag = 'input window, operand 1, single buffered']
    #allocation6 [shape = 's32[1]{0}', space=sflag, size = 0x4, scoped, tag = 'scoped memory for tpu_custom_call.1']
    #allocation7 [shape = 'u8[65536]{0}', space=vmem, size = 0x10000, scoped, tag = 'input window, operand 2, single buffered']
    #allocation8 [shape = 'u8[4096]{0}', space=vmem, size = 0x1000, scoped, tag = 'output window, operand 0, single buffered']
    %9 = vsyncpa [#allocation3], 0
    %10 = vsyncpa [#allocation6], 0
    %11 = vsyncpa [#allocation4], 0
    // Predicated region
    $region2: #{tpu_custom_call.1} parent=1 // pred_check
      _
    $region3: #{tpu_custom_call.1} parent=1 // pred_check_branch
      %13 = sbr.rel (0) target = $region5
    $region4: #{tpu_custom_call.1} parent=1 // pred_region
      %s15 = ssub.s32 1024, 1024
      %16 = vsyncadd [#allocation3], %s15
      %s18 = sshll.u32 [#allocation2], 4
      %s19 = int_to_ptr.vmem [resolvable:$true] %s18
      %21 = dma.hbm_to_vmem [thread:$0]  %s0, 1024, %s19, [#allocation3]
    $region5: #{tpu_custom_call.1} parent=1 // pred_fallthru
      _
    // Predicated region
    $region6: #{tpu_custom_call.1} parent=1 // pred_check
      _
    $region7: #{tpu_custom_call.1} parent=1 // pred_check_branch
      %23 = sbr.rel (0) target = $region9
    $region8: #{tpu_custom_call.1} parent=1 // pred_region
      %s25 = ssub.s32 16384, 16384
      %26 = vsyncadd [#allocation6], %s25
      %s27 = sshll.u32 [#allocation5], 4
      %s28 = int_to_ptr.vmem [resolvable:$true] %s27
      %33 = dma.hbm_to_vmem [thread:$0]  %s1, 16384, %s28, [#allocation6], 128, 128, 8
    $region9: #{tpu_custom_call.1} parent=1 // pred_fallthru
      _
    // Predicated region
    $region10: #{tpu_custom_call.1} parent=1 // pred_check
      _
    $region11: #{tpu_custom_call.1} parent=1 // pred_check_branch
      %35 = sbr.rel (0) target = $region13
    $region12: #{tpu_custom_call.1} parent=1 // pred_region
      %s37 = ssub.s32 2048, 2048
      %38 = vsyncadd [#allocation6], %s37
      %s39 = sshll.u32 [#allocation7], 4
      %s40 = int_to_ptr.vmem [resolvable:$true] %s39
      %45 = dma.hbm_to_vmem [thread:$0]  %s2, 2048, %s40, [#allocation6], 128, 128, 8
    $region13: #{tpu_custom_call.1} parent=1 // pred_fallthru
      _
    // Predicated region
    $region14: #{tpu_custom_call.1} parent=1 // pred_check
      _
    $region15: #{tpu_custom_call.1} parent=1 // pred_check_branch
      %47 = sbr.rel (0) target = $region17
    $region16: #{tpu_custom_call.1} parent=1 // pred_region
      _
    $region17: #{tpu_custom_call.1} parent=1 // pred_fallthru
      _
    // Predicated region
    $region18: #{tpu_custom_call.1} parent=1 // pred_check
      _
    $region19: #{tpu_custom_call.1} parent=1 // pred_check_branch
      %49 = sbr.rel (0) target = $region21
    $region20: #{tpu_custom_call.1} parent=1 // pred_region
      %50 = dma.done [#allocation3], 1024
    $region21: #{tpu_custom_call.1} parent=1 // pred_fallthru
      _
    // Predicated region
    $region22: #{tpu_custom_call.1} parent=1 // pred_check
      _
    $region23: #{tpu_custom_call.1} parent=1 // pred_check_branch
      %52 = sbr.rel (0) target = $region25
    $region24: #{tpu_custom_call.1} parent=1 // pred_region
      %53 = dma.done [#allocation6], 16384
    $region25: #{tpu_custom_call.1} parent=1 // pred_fallthru
      _
    // Predicated region
    $region26: #{tpu_custom_call.1} parent=1 // pred_check
      _
    $region27: #{tpu_custom_call.1} parent=1 // pred_check_branch
      %55 = sbr.rel (0) target = $region29
    $region28: #{tpu_custom_call.1} parent=1 // pred_region
      %56 = dma.done [#allocation6], 2048
    $region29: #{tpu_custom_call.1} parent=1 // pred_fallthru
      _
    %v57 = vld [vmem:[#allocation2] sm:$0xff]
    %v58 = vld [vmem:[#allocation2 + $0x8] sm:$0xff]
    %v59 = vld [vmem:[#allocation2 + $0x10] sm:$0xff]
    %v60 = vld [vmem:[#allocation2 + $0x18] sm:$0xff]
    %v61 = vld [vmem:[#allocation2 + $0x20] sm:$0xff]
    %v62 = vld [vmem:[#allocation2 + $0x28] sm:$0xff]
    %v63 = vld [vmem:[#allocation2 + $0x30] sm:$0xff]
    %v64 = vld [vmem:[#allocation2 + $0x38] sm:$0xff]
    %v65 = vld [vmem:[#allocation5] sm:$0xff]
    %v66 = vld [vmem:[#allocation5 + $0x8] sm:$0xff]
    %v67 = vld [vmem:[#allocation5 + $0x10] sm:$0xff]
    %v68 = vld [vmem:[#allocation5 + $0x18] sm:$0xff]
    %v69 = vld [vmem:[#allocation5 + $0x20] sm:$0xff]
    %v70 = vld [vmem:[#allocation5 + $0x28] sm:$0xff]
    %v71 = vld [vmem:[#allocation5 + $0x30] sm:$0xff]
    %v72 = vld [vmem:[#allocation5 + $0x38] sm:$0xff]
    %v73 = vld [vmem:[#allocation5 + $0x40] sm:$0xff]
    %v74 = vld [vmem:[#allocation5 + $0x48] sm:$0xff]
    %v75 = vld [vmem:[#allocation5 + $0x50] sm:$0xff]
    %v76 = vld [vmem:[#allocation5 + $0x58] sm:$0xff]
    %v77 = vld [vmem:[#allocation5 + $0x60] sm:$0xff]
    %v78 = vld [vmem:[#allocation5 + $0x68] sm:$0xff]
    %v79 = vld [vmem:[#allocation5 + $0x70] sm:$0xff]
    %v80 = vld [vmem:[#allocation5 + $0x78] sm:$0xff]
    %v81 = vld [vmem:[#allocation5 + $0x80] sm:$0xff]
    %v82 = vld [vmem:[#allocation5 + $0x88] sm:$0xff]
    %v83 = vld [vmem:[#allocation5 + $0x90] sm:$0xff]
    %v84 = vld [vmem:[#allocation5 + $0x98] sm:$0xff]
    %v85 = vld [vmem:[#allocation5 + $0xa0] sm:$0xff]
    %v86 = vld [vmem:[#allocation5 + $0xa8] sm:$0xff]
    %v87 = vld [vmem:[#allocation5 + $0xb0] sm:$0xff]
    %v88 = vld [vmem:[#allocation5 + $0xb8] sm:$0xff]
    %v89 = vld [vmem:[#allocation5 + $0xc0] sm:$0xff]
    %v90 = vld [vmem:[#allocation5 + $0xc8] sm:$0xff]
    %v91 = vld [vmem:[#allocation5 + $0xd0] sm:$0xff]
    %v92 = vld [vmem:[#allocation5 + $0xd8] sm:$0xff]
    %v93 = vld [vmem:[#allocation5 + $0xe0] sm:$0xff]
    %v94 = vld [vmem:[#allocation5 + $0xe8] sm:$0xff]
    %v95 = vld [vmem:[#allocation5 + $0xf0] sm:$0xff]
    %v96 = vld [vmem:[#allocation5 + $0xf8] sm:$0xff]
    %v97 = vld [vmem:[#allocation5 + $0x100] sm:$0xff]
    %v98 = vld [vmem:[#allocation5 + $0x108] sm:$0xff]
    %v99 = vld [vmem:[#allocation5 + $0x110] sm:$0xff]
    %v100 = vld [vmem:[#allocation5 + $0x118] sm:$0xff]
    %v101 = vld [vmem:[#allocation5 + $0x120] sm:$0xff]
    %v102 = vld [vmem:[#allocation5 + $0x128] sm:$0xff]
    %v103 = vld [vmem:[#allocation5 + $0x130] sm:$0xff]
    %v104 = vld [vmem:[#allocation5 + $0x138] sm:$0xff]
    %v105 = vld [vmem:[#allocation5 + $0x140] sm:$0xff]
    %v106 = vld [vmem:[#allocation5 + $0x148] sm:$0xff]
    %v107 = vld [vmem:[#allocation5 + $0x150] sm:$0xff]
    %v108 = vld [vmem:[#allocation5 + $0x158] sm:$0xff]
    %v109 = vld [vmem:[#allocation5 + $0x160] sm:$0xff]
    %v110 = vld [vmem:[#allocation5 + $0x168] sm:$0xff]
    %v111 = vld [vmem:[#allocation5 + $0x170] sm:$0xff]
    %v112 = vld [vmem:[#allocation5 + $0x178] sm:$0xff]
    %v113 = vld [vmem:[#allocation5 + $0x180] sm:$0xff]
    %v114 = vld [vmem:[#allocation5 + $0x188] sm:$0xff]
    %v115 = vld [vmem:[#allocation5 + $0x190] sm:$0xff]
    %v116 = vld [vmem:[#allocation5 + $0x198] sm:$0xff]
    %v117 = vld [vmem:[#allocation5 + $0x1a0] sm:$0xff]
    %v118 = vld [vmem:[#allocation5 + $0x1a8] sm:$0xff]
    %v119 = vld [vmem:[#allocation5 + $0x1b0] sm:$0xff]
    %v120 = vld [vmem:[#allocation5 + $0x1b8] sm:$0xff]
    %v121 = vld [vmem:[#allocation5 + $0x1c0] sm:$0xff]
    %v122 = vld [vmem:[#allocation5 + $0x1c8] sm:$0xff]
    %v123 = vld [vmem:[#allocation5 + $0x1d0] sm:$0xff]
    %v124 = vld [vmem:[#allocation5 + $0x1d8] sm:$0xff]
    %v125 = vld [vmem:[#allocation5 + $0x1e0] sm:$0xff]
    %v126 = vld [vmem:[#allocation5 + $0x1e8] sm:$0xff]
    %v127 = vld [vmem:[#allocation5 + $0x1f0] sm:$0xff]
    %v128 = vld [vmem:[#allocation5 + $0x1f8] sm:$0xff]
    %v129 = vld [vmem:[#allocation5 + $0x200] sm:$0xff]
    %v130 = vld [vmem:[#allocation5 + $0x208] sm:$0xff]
    %v131 = vld [vmem:[#allocation5 + $0x210] sm:$0xff]
    %v132 = vld [vmem:[#allocation5 + $0x218] sm:$0xff]
    %v133 = vld [vmem:[#allocation5 + $0x220] sm:$0xff]
    %v134 = vld [vmem:[#allocation5 + $0x228] sm:$0xff]
    %v135 = vld [vmem:[#allocation5 + $0x230] sm:$0xff]
    %v136 = vld [vmem:[#allocation5 + $0x238] sm:$0xff]
    %v137 = vld [vmem:[#allocation5 + $0x240] sm:$0xff]
    %v138 = vld [vmem:[#allocation5 + $0x248] sm:$0xff]
    %v139 = vld [vmem:[#allocation5 + $0x250] sm:$0xff]
    %v140 = vld [vmem:[#allocation5 + $0x258] sm:$0xff]
    %v141 = vld [vmem:[#allocation5 + $0x260] sm:$0xff]
    %v142 = vld [vmem:[#allocation5 + $0x268] sm:$0xff]
    %v143 = vld [vmem:[#allocation5 + $0x270] sm:$0xff]
    %v144 = vld [vmem:[#allocation5 + $0x278] sm:$0xff]
    %v145 = vld [vmem:[#allocation5 + $0x280] sm:$0xff]
    %v146 = vld [vmem:[#allocation5 + $0x288] sm:$0xff]
    %v147 = vld [vmem:[#allocation5 + $0x290] sm:$0xff]
    %v148 = vld [vmem:[#allocation5 + $0x298] sm:$0xff]
    %v149 = vld [vmem:[#allocation5 + $0x2a0] sm:$0xff]
    %v150 = vld [vmem:[#allocation5 + $0x2a8] sm:$0xff]
    %v151 = vld [vmem:[#allocation5 + $0x2b0] sm:$0xff]
    %v152 = vld [vmem:[#allocation5 + $0x2b8] sm:$0xff]
    %v153 = vld [vmem:[#allocation5 + $0x2c0] sm:$0xff]
    %v154 = vld [vmem:[#allocation5 + $0x2c8] sm:$0xff]
    %v155 = vld [vmem:[#allocation5 + $0x2d0] sm:$0xff]
    %v156 = vld [vmem:[#allocation5 + $0x2d8] sm:$0xff]
    %v157 = vld [vmem:[#allocation5 + $0x2e0] sm:$0xff]
    %v158 = vld [vmem:[#allocation5 + $0x2e8] sm:$0xff]
    %v159 = vld [vmem:[#allocation5 + $0x2f0] sm:$0xff]
    %v160 = vld [vmem:[#allocation5 + $0x2f8] sm:$0xff]
    %v161 = vld [vmem:[#allocation5 + $0x300] sm:$0xff]
    %v162 = vld [vmem:[#allocation5 + $0x308] sm:$0xff]
    %v163 = vld [vmem:[#allocation5 + $0x310] sm:$0xff]
    %v164 = vld [vmem:[#allocation5 + $0x318] sm:$0xff]
    %v165 = vld [vmem:[#allocation5 + $0x320] sm:$0xff]
    %v166 = vld [vmem:[#allocation5 + $0x328] sm:$0xff]
    %v167 = vld [vmem:[#allocation5 + $0x330] sm:$0xff]
    %v168 = vld [vmem:[#allocation5 + $0x338] sm:$0xff]
    %v169 = vld [vmem:[#allocation5 + $0x340] sm:$0xff]
    %v170 = vld [vmem:[#allocation5 + $0x348] sm:$0xff]
    %v171 = vld [vmem:[#allocation5 + $0x350] sm:$0xff]
    %v172 = vld [vmem:[#allocation5 + $0x358] sm:$0xff]
    %v173 = vld [vmem:[#allocation5 + $0x360] sm:$0xff]
    %v174 = vld [vmem:[#allocation5 + $0x368] sm:$0xff]
    %v175 = vld [vmem:[#allocation5 + $0x370] sm:$0xff]
    %v176 = vld [vmem:[#allocation5 + $0x378] sm:$0xff]
    %v177 = vld [vmem:[#allocation5 + $0x380] sm:$0xff]
    %v178 = vld [vmem:[#allocation5 + $0x388] sm:$0xff]
    %v179 = vld [vmem:[#allocation5 + $0x390] sm:$0xff]
    %v180 = vld [vmem:[#allocation5 + $0x398] sm:$0xff]
    %v181 = vld [vmem:[#allocation5 + $0x3a0] sm:$0xff]
    %v182 = vld [vmem:[#allocation5 + $0x3a8] sm:$0xff]
    %v183 = vld [vmem:[#allocation5 + $0x3b0] sm:$0xff]
    %v184 = vld [vmem:[#allocation5 + $0x3b8] sm:$0xff]
    %v185 = vld [vmem:[#allocation5 + $0x3c0] sm:$0xff]
    %v186 = vld [vmem:[#allocation5 + $0x3c8] sm:$0xff]
    %v187 = vld [vmem:[#allocation5 + $0x3d0] sm:$0xff]
    %v188 = vld [vmem:[#allocation5 + $0x3d8] sm:$0xff]
    %v189 = vld [vmem:[#allocation5 + $0x3e0] sm:$0xff]
    %v190 = vld [vmem:[#allocation5 + $0x3e8] sm:$0xff]
    %v191 = vld [vmem:[#allocation5 + $0x3f0] sm:$0xff]
    %v192 = vld [vmem:[#allocation5 + $0x3f8] sm:$0xff]
    %v193 = vld [vmem:[%s3] sm:$0x1]
    %v194 = vlaneseq
    %v195 = vshrl.u32 %v194, 7
    %v196 = vsub.s32 0, %v195
    %v197 = vrot.slane %v193, %v196
    %198 = vmatprep.subr.mxu0 0.0
    %199 = vmatpush1.msra.mxu0 %v65
    %200 = vmatprep.subr.mxu0 0.0
    %201 = vmatpush1.msra.mxu0 %v66
    %202 = vmatprep.subr.mxu0 0.0
    %203 = vmatpush1.msra.mxu0 %v67
    %204 = vmatprep.subr.mxu0 0.0
    %205 = vmatpush1.msra.mxu0 %v68
    %206 = vmatprep.subr.mxu0 0.0
    %207 = vmatpush1.msra.mxu0 %v69
    %208 = vmatprep.subr.mxu0 0.0
    %209 = vmatpush1.msra.mxu0 %v70
    %210 = vmatprep.subr.mxu0 0.0
    %211 = vmatpush1.msra.mxu0 %v71
    %212 = vmatprep.subr.mxu0 0.0
    %213 = vmatpush1.msra.mxu0 %v72
    %214 = vmatprep.subr.mxu0 0.0
    %215 = vmatpush1.msra.mxu0 %v73
    %216 = vmatprep.subr.mxu0 0.0
    %217 = vmatpush1.msra.mxu0 %v74
    %218 = vmatprep.subr.mxu0 0.0
    %219 = vmatpush1.msra.mxu0 %v75
    %220 = vmatprep.subr.mxu0 0.0
    %221 = vmatpush1.msra.mxu0 %v76
    %222 = vmatprep.subr.mxu0 0.0
    %223 = vmatpush1.msra.mxu0 %v77
    %224 = vmatprep.subr.mxu0 0.0
    %225 = vmatpush1.msra.mxu0 %v78
    %226 = vmatprep.subr.mxu0 0.0
    %227 = vmatpush1.msra.mxu0 %v79
    %228 = vmatprep.subr.mxu0 0.0
    %229 = vmatpush1.msra.mxu0 %v80
    %230 = vmatprep.subr.mxu0 0.0
    %231 = vmatpush1.msra.mxu0 %v81
    %232 = vmatprep.subr.mxu0 0.0
    %233 = vmatpush1.msra.mxu0 %v82
    %234 = vmatprep.subr.mxu0 0.0
    %235 = vmatpush1.msra.mxu0 %v83
    %236 = vmatprep.subr.mxu0 0.0
    %237 = vmatpush1.msra.mxu0 %v84
    %238 = vmatprep.subr.mxu0 0.0
    %239 = vmatpush1.msra.mxu0 %v85
    %240 = vmatprep.subr.mxu0 0.0
    %241 = vmatpush1.msra.mxu0 %v86
    %242 = vmatprep.subr.mxu0 0.0
    %243 = vmatpush1.msra.mxu0 %v87
    %244 = vmatprep.subr.mxu0 0.0
    %245 = vmatpush1.msra.mxu0 %v88
    %246 = vmatprep.subr.mxu0 0.0
    %247 = vmatpush1.msra.mxu0 %v89
    %248 = vmatprep.subr.mxu0 0.0
    %249 = vmatpush1.msra.mxu0 %v90
    %250 = vmatprep.subr.mxu0 0.0
    %251 = vmatpush1.msra.mxu0 %v91
    %252 = vmatprep.subr.mxu0 0.0
    %253 = vmatpush1.msra.mxu0 %v92
    %254 = vmatprep.subr.mxu0 0.0
    %255 = vmatpush1.msra.mxu0 %v93
    %256 = vmatprep.subr.mxu0 0.0
    %257 = vmatpush1.msra.mxu0 %v94
    %258 = vmatprep.subr.mxu0 0.0
    %259 = vmatpush1.msra.mxu0 %v95
    %260 = vmatprep.subr.mxu0 0.0
    %261 = vmatpush1.msra.mxu0 %v96
    %262 = vmatprep.mubr.f32.mxu0 %v58
    %263 = vmatmul.mubr.f32.gmra.mrb[0].mxu0 %v57
    %v264 = vpop.f32.mrb[0].mxu0
    %v265 = vadd.f32 %v197, %v264
    %v266 = vpop.f32.mrb[0].mxu0
    %267 = vdwg.mxu0
    %268 = vmatprep.subr.mxu0 0.0
    %269 = vmatpush1.msra.mxu0 %v97
    %270 = vmatprep.subr.mxu0 0.0
    %271 = vmatpush1.msra.mxu0 %v98
    %272 = vmatprep.subr.mxu0 0.0
    %273 = vmatpush1.msra.mxu0 %v99
    %274 = vmatprep.subr.mxu0 0.0
    %275 = vmatpush1.msra.mxu0 %v100
    %276 = vmatprep.subr.mxu0 0.0
    %277 = vmatpush1.msra.mxu0 %v101
    %278 = vmatprep.subr.mxu0 0.0
    %279 = vmatpush1.msra.mxu0 %v102
    %280 = vmatprep.subr.mxu0 0.0
    %281 = vmatpush1.msra.mxu0 %v103
    %282 = vmatprep.subr.mxu0 0.0
    %283 = vmatpush1.msra.mxu0 %v104
    %284 = vmatprep.subr.mxu0 0.0
    %285 = vmatpush1.msra.mxu0 %v105
    %286 = vmatprep.subr.mxu0 0.0
    %287 = vmatpush1.msra.mxu0 %v106
    %288 = vmatprep.subr.mxu0 0.0
    %289 = vmatpush1.msra.mxu0 %v107
    %290 = vmatprep.subr.mxu0 0.0
    %291 = vmatpush1.msra.mxu0 %v108
    %292 = vmatprep.subr.mxu0 0.0
    %293 = vmatpush1.msra.mxu0 %v109
    %294 = vmatprep.subr.mxu0 0.0
    %295 = vmatpush1.msra.mxu0 %v110
    %296 = vmatprep.subr.mxu0 0.0
    %297 = vmatpush1.msra.mxu0 %v111
    %298 = vmatprep.subr.mxu0 0.0
    %299 = vmatpush1.msra.mxu0 %v112
    %300 = vmatprep.subr.mxu0 0.0
    %301 = vmatpush1.msra.mxu0 %v113
    %302 = vmatprep.subr.mxu0 0.0
    %303 = vmatpush1.msra.mxu0 %v114
    %304 = vmatprep.subr.mxu0 0.0
    %305 = vmatpush1.msra.mxu0 %v115
    %306 = vmatprep.subr.mxu0 0.0
    %307 = vmatpush1.msra.mxu0 %v116
    %308 = vmatprep.subr.mxu0 0.0
    %309 = vmatpush1.msra.mxu0 %v117
    %310 = vmatprep.subr.mxu0 0.0
    %311 = vmatpush1.msra.mxu0 %v118
    %312 = vmatprep.subr.mxu0 0.0
    %313 = vmatpush1.msra.mxu0 %v119
    %314 = vmatprep.subr.mxu0 0.0
    %315 = vmatpush1.msra.mxu0 %v120
    %316 = vmatprep.subr.mxu0 0.0
    %317 = vmatpush1.msra.mxu0 %v121
    %318 = vmatprep.subr.mxu0 0.0
    %319 = vmatpush1.msra.mxu0 %v122
    %320 = vmatprep.subr.mxu0 0.0
    %321 = vmatpush1.msra.mxu0 %v123
    %322 = vmatprep.subr.mxu0 0.0
    %323 = vmatpush1.msra.mxu0 %v124
    %324 = vmatprep.subr.mxu0 0.0
    %325 = vmatpush1.msra.mxu0 %v125
    %326 = vmatprep.subr.mxu0 0.0
    %327 = vmatpush1.msra.mxu0 %v126
    %328 = vmatprep.subr.mxu0 0.0
    %329 = vmatpush1.msra.mxu0 %v127
    %330 = vmatprep.subr.mxu0 0.0
    %331 = vmatpush1.msra.mxu0 %v128
    %332 = vmatprep.mubr.f32.mxu0 %v60
    %333 = vmatmul.mubr.f32.gmra.mrb[0].mxu0 %v59
    %v334 = vpop.f32.mrb[0].mxu0
    %v335 = vadd.f32 %v265, %v334
    %v336 = vpop.f32.mrb[0].mxu0
    %337 = vdwg.mxu0
    %338 = vmatprep.subr.mxu0 0.0
    %339 = vmatpush1.msra.mxu0 %v129
    %340 = vmatprep.subr.mxu0 0.0
    %341 = vmatpush1.msra.mxu0 %v130
    %342 = vmatprep.subr.mxu0 0.0
    %343 = vmatpush1.msra.mxu0 %v131
    %344 = vmatprep.subr.mxu0 0.0
    %345 = vmatpush1.msra.mxu0 %v132
    %346 = vmatprep.subr.mxu0 0.0
    %347 = vmatpush1.msra.mxu0 %v133
    %348 = vmatprep.subr.mxu0 0.0
    %349 = vmatpush1.msra.mxu0 %v134
    %350 = vmatprep.subr.mxu0 0.0
    %351 = vmatpush1.msra.mxu0 %v135
    %352 = vmatprep.subr.mxu0 0.0
    %353 = vmatpush1.msra.mxu0 %v136
    %354 = vmatprep.subr.mxu0 0.0
    %355 = vmatpush1.msra.mxu0 %v137
    %356 = vmatprep.subr.mxu0 0.0
    %357 = vmatpush1.msra.mxu0 %v138
    %358 = vmatprep.subr.mxu0 0.0
    %359 = vmatpush1.msra.mxu0 %v139
    %360 = vmatprep.subr.mxu0 0.0
    %361 = vmatpush1.msra.mxu0 %v140
    %362 = vmatprep.subr.mxu0 0.0
    %363 = vmatpush1.msra.mxu0 %v141
    %364 = vmatprep.subr.mxu0 0.0
    %365 = vmatpush1.msra.mxu0 %v142
    %366 = vmatprep.subr.mxu0 0.0
    %367 = vmatpush1.msra.mxu0 %v143
    %368 = vmatprep.subr.mxu0 0.0
    %369 = vmatpush1.msra.mxu0 %v144
    %370 = vmatprep.subr.mxu0 0.0
    %371 = vmatpush1.msra.mxu0 %v145
    %372 = vmatprep.subr.mxu0 0.0
    %373 = vmatpush1.msra.mxu0 %v146
    %374 = vmatprep.subr.mxu0 0.0
    %375 = vmatpush1.msra.mxu0 %v147
    %376 = vmatprep.subr.mxu0 0.0
    %377 = vmatpush1.msra.mxu0 %v148
    %378 = vmatprep.subr.mxu0 0.0
    %379 = vmatpush1.msra.mxu0 %v149
    %380 = vmatprep.subr.mxu0 0.0
    %381 = vmatpush1.msra.mxu0 %v150
    %382 = vmatprep.subr.mxu0 0.0
    %383 = vmatpush1.msra.mxu0 %v151
    %384 = vmatprep.subr.mxu0 0.0
    %385 = vmatpush1.msra.mxu0 %v152
    %386 = vmatprep.subr.mxu0 0.0
    %387 = vmatpush1.msra.mxu0 %v153
    %388 = vmatprep.subr.mxu0 0.0
    %389 = vmatpush1.msra.mxu0 %v154
    %390 = vmatprep.subr.mxu0 0.0
    %391 = vmatpush1.msra.mxu0 %v155
    %392 = vmatprep.subr.mxu0 0.0
    %393 = vmatpush1.msra.mxu0 %v156
    %394 = vmatprep.subr.mxu0 0.0
    %395 = vmatpush1.msra.mxu0 %v157
    %396 = vmatprep.subr.mxu0 0.0
    %397 = vmatpush1.msra.mxu0 %v158
    %398 = vmatprep.subr.mxu0 0.0
    %399 = vmatpush1.msra.mxu0 %v159
    %400 = vmatprep.subr.mxu0 0.0
    %401 = vmatpush1.msra.mxu0 %v160
    %402 = vmatprep.mubr.f32.mxu0 %v62
    %403 = vmatmul.mubr.f32.gmra.mrb[0].mxu0 %v61
    %v404 = vpop.f32.mrb[0].mxu0
    %v405 = vadd.f32 %v335, %v404
    %v406 = vpop.f32.mrb[0].mxu0
    %407 = vdwg.mxu0
    %408 = vmatprep.subr.mxu0 0.0
    %409 = vmatpush1.msra.mxu0 %v161
    %410 = vmatprep.subr.mxu0 0.0
    %411 = vmatpush1.msra.mxu0 %v162
    %412 = vmatprep.subr.mxu0 0.0
    %413 = vmatpush1.msra.mxu0 %v163
    %414 = vmatprep.subr.mxu0 0.0
    %415 = vmatpush1.msra.mxu0 %v164
    %416 = vmatprep.subr.mxu0 0.0
    %417 = vmatpush1.msra.mxu0 %v165
    %418 = vmatprep.subr.mxu0 0.0
    %419 = vmatpush1.msra.mxu0 %v166
    %420 = vmatprep.subr.mxu0 0.0
    %421 = vmatpush1.msra.mxu0 %v167
    %422 = vmatprep.subr.mxu0 0.0
    %423 = vmatpush1.msra.mxu0 %v168
    %424 = vmatprep.subr.mxu0 0.0
    %425 = vmatpush1.msra.mxu0 %v169
    %426 = vmatprep.subr.mxu0 0.0
    %427 = vmatpush1.msra.mxu0 %v170
    %428 = vmatprep.subr.mxu0 0.0
    %429 = vmatpush1.msra.mxu0 %v171
    %430 = vmatprep.subr.mxu0 0.0
    %431 = vmatpush1.msra.mxu0 %v172
    %432 = vmatprep.subr.mxu0 0.0
    %433 = vmatpush1.msra.mxu0 %v173
    %434 = vmatprep.subr.mxu0 0.0
    %435 = vmatpush1.msra.mxu0 %v174
    %436 = vmatprep.subr.mxu0 0.0
    %437 = vmatpush1.msra.mxu0 %v175
    %438 = vmatprep.subr.mxu0 0.0
    %439 = vmatpush1.msra.mxu0 %v176
    %440 = vmatprep.subr.mxu0 0.0
    %441 = vmatpush1.msra.mxu0 %v177
    %442 = vmatprep.subr.mxu0 0.0
    %443 = vmatpush1.msra.mxu0 %v178
    %444 = vmatprep.subr.mxu0 0.0
    %445 = vmatpush1.msra.mxu0 %v179
    %446 = vmatprep.subr.mxu0 0.0
    %447 = vmatpush1.msra.mxu0 %v180
    %448 = vmatprep.subr.mxu0 0.0
    %449 = vmatpush1.msra.mxu0 %v181
    %450 = vmatprep.subr.mxu0 0.0
    %451 = vmatpush1.msra.mxu0 %v182
    %452 = vmatprep.subr.mxu0 0.0
    %453 = vmatpush1.msra.mxu0 %v183
    %454 = vmatprep.subr.mxu0 0.0
    %455 = vmatpush1.msra.mxu0 %v184
    %456 = vmatprep.subr.mxu0 0.0
    %457 = vmatpush1.msra.mxu0 %v185
    %458 = vmatprep.subr.mxu0 0.0
    %459 = vmatpush1.msra.mxu0 %v186
    %460 = vmatprep.subr.mxu0 0.0
    %461 = vmatpush1.msra.mxu0 %v187
    %462 = vmatprep.subr.mxu0 0.0
    %463 = vmatpush1.msra.mxu0 %v188
    %464 = vmatprep.subr.mxu0 0.0
    %465 = vmatpush1.msra.mxu0 %v189
    %466 = vmatprep.subr.mxu0 0.0
    %467 = vmatpush1.msra.mxu0 %v190
    %468 = vmatprep.subr.mxu0 0.0
    %469 = vmatpush1.msra.mxu0 %v191
    %470 = vmatprep.subr.mxu0 0.0
    %471 = vmatpush1.msra.mxu0 %v192
    %472 = vmatprep.mubr.f32.mxu0 %v64
    %473 = vmatmul.mubr.f32.gmra.mrb[0].mxu0 %v63
    %v474 = vpop.f32.mrb[0].mxu0
    %v475 = vadd.f32 %v405, %v474
    %v476 = vpop.f32.mrb[0].mxu0
    %477 = vdwg.mxu0
    %v478 = vmax.f32 %v475, 0.0
    %v479 = vld [vmem:[#allocation7] sm:$0xff]
    %v480 = vld [vmem:[#allocation7 + $0x8] sm:$0xff]
    %v481 = vld [vmem:[#allocation7 + $0x10] sm:$0xff]
    %v482 = vld [vmem:[#allocation7 + $0x18] sm:$0xff]
    %v483 = vld [vmem:[#allocation7 + $0x20] sm:$0xff]
    %v484 = vld [vmem:[#allocation7 + $0x28] sm:$0xff]
    %v485 = vld [vmem:[#allocation7 + $0x30] sm:$0xff]
    %v486 = vld [vmem:[#allocation7 + $0x38] sm:$0xff]
    %v487 = vld [vmem:[#allocation7 + $0x40] sm:$0xff]
    %v488 = vld [vmem:[#allocation7 + $0x48] sm:$0xff]
    %v489 = vld [vmem:[#allocation7 + $0x50] sm:$0xff]
    %v490 = vld [vmem:[#allocation7 + $0x58] sm:$0xff]
    %v491 = vld [vmem:[#allocation7 + $0x60] sm:$0xff]
    %v492 = vld [vmem:[#allocation7 + $0x68] sm:$0xff]
    %v493 = vld [vmem:[#allocation7 + $0x70] sm:$0xff]
    %v494 = vld [vmem:[#allocation7 + $0x78] sm:$0xff]
    %v495 = vld [vmem:[%s3 + $0x1] sm:$0x1]
    %v496 = vlaneseq
    %v497 = vshrl.u32 %v496, 7
    %v498 = vsub.s32 0, %v497
    %v499 = vrot.slane %v495, %v498
    %500 = vmatprep.subr.mxu0 0.0
    %501 = vmatpush1.msra.mxu0 %v479
    %502 = vmatprep.subr.mxu0 0.0
    %503 = vmatpush1.msra.mxu0 %v480
    %504 = vmatprep.subr.mxu0 0.0
    %505 = vmatpush1.msra.mxu0 %v481
    %506 = vmatprep.subr.mxu0 0.0
    %507 = vmatpush1.msra.mxu0 %v482
    %508 = vmatprep.subr.mxu0 0.0
    %509 = vmatpush1.msra.mxu0 %v483
    %510 = vmatprep.subr.mxu0 0.0
    %511 = vmatpush1.msra.mxu0 %v484
    %512 = vmatprep.subr.mxu0 0.0
    %513 = vmatpush1.msra.mxu0 %v485
    %514 = vmatprep.subr.mxu0 0.0
    %515 = vmatpush1.msra.mxu0 %v486
    %516 = vmatprep.subr.mxu0 0.0
    %517 = vmatpush1.msra.mxu0 %v487
    %518 = vmatprep.subr.mxu0 0.0
    %519 = vmatpush1.msra.mxu0 %v488
    %520 = vmatprep.subr.mxu0 0.0
    %521 = vmatpush1.msra.mxu0 %v489
    %522 = vmatprep.subr.mxu0 0.0
    %523 = vmatpush1.msra.mxu0 %v490
    %524 = vmatprep.subr.mxu0 0.0
    %525 = vmatpush1.msra.mxu0 %v491
    %526 = vmatprep.subr.mxu0 0.0
    %527 = vmatpush1.msra.mxu0 %v492
    %528 = vmatprep.subr.mxu0 0.0
    %529 = vmatpush1.msra.mxu0 %v493
    %530 = vmatprep.subr.mxu0 0.0
    %531 = vmatpush1.msra.mxu0 %v494
    %532 = vmatprep.subr.mxu0 0.0
    %533 = vmatpush1.msra.mxu0 0.0
    %534 = vmatprep.subr.mxu0 0.0
    %535 = vmatpush1.msra.mxu0 0.0
    %536 = vmatprep.subr.mxu0 0.0
    %537 = vmatpush1.msra.mxu0 0.0
    %538 = vmatprep.subr.mxu0 0.0
    %539 = vmatpush1.msra.mxu0 0.0
    %540 = vmatprep.subr.mxu0 0.0
    %541 = vmatpush1.msra.mxu0 0.0
    %542 = vmatprep.subr.mxu0 0.0
    %543 = vmatpush1.msra.mxu0 0.0
    %544 = vmatprep.subr.mxu0 0.0
    %545 = vmatpush1.msra.mxu0 0.0
    %546 = vmatprep.subr.mxu0 0.0
    %547 = vmatpush1.msra.mxu0 0.0
    %548 = vmatprep.subr.mxu0 0.0
    %549 = vmatpush1.msra.mxu0 0.0
    %550 = vmatprep.subr.mxu0 0.0
    %551 = vmatpush1.msra.mxu0 0.0
    %552 = vmatprep.subr.mxu0 0.0
    %553 = vmatpush1.msra.mxu0 0.0
    %554 = vmatprep.subr.mxu0 0.0
    %555 = vmatpush1.msra.mxu0 0.0
    %556 = vmatprep.subr.mxu0 0.0
    %557 = vmatpush1.msra.mxu0 0.0
    %558 = vmatprep.subr.mxu0 0.0
    %559 = vmatpush1.msra.mxu0 0.0
    %560 = vmatprep.subr.mxu0 0.0
    %561 = vmatpush1.msra.mxu0 0.0
    %562 = vmatprep.subr.mxu0 0.0
    %563 = vmatpush1.msra.mxu0 0.0
    %564 = vmatprep.mubr.f32.mxu0 0.0
    %565 = vmatmul.mubr.f32.gmra.mrb[0].mxu0 %v478
    %v566 = vpop.f32.mrb[0].mxu0
    %v567 = vadd.f32 %v499, %v566
    %v568 = vpop.f32.mrb[0].mxu0
    %569 = vdwg.mxu0
    %570 = vst [vmem:[#allocation8] sm:$0xff] %v567
    // Predicated region
    $region30: #{tpu_custom_call.1} parent=1 // pred_check
      _
    $region31: #{tpu_custom_call.1} parent=1 // pred_check_branch
      %572 = sbr.rel (0) target = $region33
    $region32: #{tpu_custom_call.1} parent=1 // pred_region
      %s574 = ssub.s32 128, 128
      %575 = vsyncadd [#allocation4], %s574
      %s577 = sshll.u32 [#allocation8], 4
      %s578 = int_to_ptr.vmem [resolvable:$true] %s577
      %580 = dma.vmem_to_hbm [thread:$0]  %s578, 128, %s4, [#allocation4]
    $region33: #{tpu_custom_call.1} parent=1 // pred_fallthru
      _
    // Predicated region
    $region34: #{tpu_custom_call.1} parent=1 // pred_check
      _
    $region35: #{tpu_custom_call.1} parent=1 // pred_check_branch
      %582 = sbr.rel (0) target = $region37
    $region36: #{tpu_custom_call.1} parent=1 // pred_region
      %583 = dma.done [#allocation4], 128
    $region37: #{tpu_custom_call.1} parent=1 // pred_fallthru
      _
    %584 = vsyncpa [#allocation3], 1
    %585 = vsyncpa [#allocation6], 1
    %586 = vsyncpa [#allocation4], 1

</llo_original>
